<compile_context>
chip_gen: v5e
topology: v5e:2x2
jax: 0.10.0
libtpu: 0.0.40
codegen_flags: <defaults>
</compile_context>

<pallas_src>
from functools import lru_cache

import jax
import jax.numpy as jnp
from jax.experimental import pallas as pl
from jax.experimental.pallas import tpu as pltpu

CLS_ID = 101
SEP_ID = 102
PAD_ID = 0
MAX_LENGTH = 77          # module default
VOCAB_SIZE = 30522       # bert-base-uncased vocab size
_LANE_W = 128            # lane-dense working width (>= MAX_LENGTH)
_LEN_LANE = _LANE_W - 1  # dead lane (cols >= 77 are always PAD) -> carries the length
_MAX_TB = 4096           # default batch tile; 8 MiB double-buffered int32 footprint (v5e-safe)
_SPLIT_B = 2048          # above this, keep grid >= 2 so both v7x TCs get work
_SMALL_B = 1024          # at/below this, the pure-JAX path beats pallas_call launch overhead


def _round_up(x, m):
    return ((x + m - 1) // m) * m


def _tokenize_pack_kernel(raw_ref, out_ref):
    """Build [CLS] + ids[:eff] + [SEP] + [PAD]*; length is carried in lane _LEN_LANE."""
    TB, W = out_ref.shape
    raw = raw_ref[...]                                          # [TB, W] ids (lane 127 = length)
    lens = raw[:, _LEN_LANE:_LEN_LANE + 1].astype(jnp.int32)    # [TB, 1]
    eff = jnp.clip(lens, 0, MAX_LENGTH - 2)                     # room for [CLS]/[SEP]

    pos = jax.lax.broadcasted_iota(jnp.int32, (TB, W), 1)       # 2-D iota (TPU requirement)
    # shifted[:, t] = raw[:, t-1]; the wrapped-around column 0 is overwritten by CLS below.
    shifted = pltpu.roll(raw, shift=1, axis=1)                  # XLU slot: free under the DMA stream

    out = jnp.where(pos == 0, CLS_ID,
          jnp.where(pos <= eff, shifted,
          jnp.where(pos == eff + 1, SEP_ID, PAD_ID)))
    out_ref[...] = out.astype(out_ref.dtype)


@lru_cache(maxsize=None)
def _build_pack_call(B, W, dtype_name, TB, vmem_limit, alias_input):
    """Cached (per shape/dtype/tile) jitted pallas_call; donates the input when aliased."""
    dtype = jnp.dtype(dtype_name)
    cp = dict(dimension_semantics=("parallel",))   # shards the batch grid across v7x's 2 TCs
    if vmem_limit is not None:
        cp["vmem_limit_bytes"] = int(vmem_limit)
    call = pl.pallas_call(
        _tokenize_pack_kernel,
        out_shape=jax.ShapeDtypeStruct((B, W), dtype),
        grid=(pl.cdiv(B, TB),),
        in_specs=[pl.BlockSpec((TB, W), lambda i: (i, 0))],
        out_specs=pl.BlockSpec((TB, W), lambda i: (i, 0)),
        input_output_aliases=({0: 0} if alias_input else {}),
        compiler_params=pltpu.CompilerParams(**cp),
    )
    return jax.jit(call, donate_argnums=((0,) if alias_input else ()))


def _pack_jax(packed):
    """Pure-JAX path with identical math (small-batch dispatch)."""
    _, W = packed.shape
    lens = packed[:, _LEN_LANE:_LEN_LANE + 1].astype(jnp.int32)
    eff = jnp.clip(lens, 0, MAX_LENGTH - 2)
    pos = jnp.arange(W, dtype=jnp.int32)[None, :]
    shifted = jnp.pad(packed[:, :W - 1], ((0, 0), (1, 0)))
    out = jnp.where(pos == 0, CLS_ID,
          jnp.where(pos <= eff, shifted,
          jnp.where(pos == eff + 1, SEP_ID, PAD_ID)))
    return out.astype(packed.dtype)


def bert_tokenize_pad(raw_ids, lengths=None, *, max_tb=_MAX_TB, force_kernel=False):
    """raw_ids: [B, L] int16/int32 pre-tokenized wordpiece ids; lengths: [B] valid counts.

    Preferred zero-copy contract: hand in a lane-aligned [B, 128] array with the
    valid length already stored in lane 127 and lengths=None (no wrapper copy).

    Returns input_ids [B, 128] (lane-dense slab, caller dtype).  Columns 0..76
    match tokenizer(text, truncation=True, max_length=77, padding='max_length');
    columns 77..127 are PAD_ID (0).  Widen to int64 at the framework boundary
    if strict PyTorch parity is required.
    """
    B, L = raw_ids.shape
    W = _LANE_W
    dtype = raw_ids.dtype
    n_tok = min(L, MAX_LENGTH - 2)   # only the first 75 ids can ever appear in the output

    if lengths is None:
        assert L == W, "pre-packed input must be [B, 128] with the length in lane 127"
        packed = raw_ids
        own_packed = False           # caller owns the buffer: don't alias/donate it
    else:
        lens = jnp.clip(lengths.astype(jnp.int32), 0, n_tok).astype(dtype)
        if L == W:
            packed = raw_ids.at[:, _LEN_LANE].set(lens)
        else:
            packed = (jnp.zeros((B, W), dtype)
                      .at[:, :n_tok].set(raw_ids[:, :n_tok])
                      .at[:, _LEN_LANE].set(lens))
        own_packed = True            # fresh array -> safe to alias + donate

    if B <= _SMALL_B and not force_kernel:
        return _pack_jax(packed)     # launch overhead dominates a single-step pallas_call

    # --- batch tile selection ---
    if B > _SPLIT_B:
        target = min(max_tb, pl.cdiv(B, 2))     # >= 2 grid steps for v7x's 2 TCs
    elif B > max_tb:
        target = max_tb
    else:
        target = B
    if target == B:
        TB = B                                  # full-dim block: no (8,128) divisibility needed
    else:
        TB = _round_up(target, 16)              # 16 keeps int16 (16,128) tiles legal too
        if TB >= B:
            TB = B

    itemsize = jnp.dtype(dtype).itemsize
    footprint = 2 * 2 * TB * W * itemsize       # (in + out) x double-buffered
    vmem_limit = footprint + (4 << 20) if footprint > (12 << 20) else None

    call = _build_pack_call(B, W, jnp.dtype(dtype).name, TB, vmem_limit, own_packed)
    return call(packed)   # lane-dense [B, 128]; slice [:, :77] only at the framework boundary


def _reference(raw_ids, lengths, max_length=MAX_LENGTH):
    """Independent pure-JAX reference of the truncate/[CLS]/[SEP]/pad semantics."""
    B, L = raw_ids.shape
    eff = jnp.clip(lengths.astype(jnp.int32), 0, max_length - 2)[:, None]
    n = min(L, max_length - 1)
    buf = jnp.zeros((B, max_length), jnp.int32).at[:, 1:1 + n].set(raw_ids[:, :n].astype(jnp.int32))
    pos = jnp.arange(max_length, dtype=jnp.int32)[None, :]
    return jnp.where(pos == 0, CLS_ID,
           jnp.where(pos <= eff, buf,
           jnp.where(pos == eff + 1, SEP_ID, PAD_ID)))


if __name__ == "__main__":
    # TODO(synk): the string -> wordpiece-id lookup (HuggingFace BertTokenizerFast) is CPU
    # string processing with no Pallas equivalent; we start from pre-tokenized integer ids.
    key = jax.random.PRNGKey(0)
    B = 8
    kid, klen = jax.random.split(key)
    raw_ids = jax.random.randint(kid, (B, _LANE_W), 1000, VOCAB_SIZE, dtype=jnp.int32)
    lengths = jax.random.randint(klen, (B,), 0, 120, dtype=jnp.int32)
    lengths = lengths.at[0].set(8).at[1].set(90)   # one padded row, one truncated row

    # Pallas path (force_kernel bypasses the small-batch pure-JAX dispatch for this demo).
    tokens = jax.block_until_ready(bert_tokenize_pad(raw_ids, lengths, force_kernel=True))

    expected = _reference(raw_ids, lengths)
    assert tokens.shape == (B, _LANE_W), tokens.shape
    assert tokens.dtype == jnp.int32
    assert bool(jnp.all(tokens[:, :MAX_LENGTH] == expected.astype(tokens.dtype))), "mismatch vs reference"
    assert bool(jnp.all(tokens[:, MAX_LENGTH:] == PAD_ID)), "tail not PAD"

    # Auto-dispatch path (small batch -> fused pure-JAX) must agree bit-for-bit.
    tokens_small = jax.block_until_ready(bert_tokenize_pad(raw_ids, lengths))
    assert bool(jnp.all(tokens_small == tokens)), "small-batch path mismatch"

    print("KERNEL_OK")
</pallas_src>

<mosaic_0001>
module attributes {stable_mosaic.version = 11 : i64} {
  func.func @_tokenize_pack_kernel(%arg0: i32, %arg1: memref<8x128xi32, #tpu.memory_space<vmem>>, %arg2: memref<8x128xi32, #tpu.memory_space<vmem>>) attributes {dimension_semantics = [#tpu.dimension_semantics<parallel>], iteration_bounds = array<i64: 1>, scalar_prefetch = 0 : i64, scratch_operands = 0 : i64, tpu.core_type = #tpu.core_type<tc>, window_params = [{transform_indices = @transform_0, window_bounds = array<i64: 8, 128>}, {transform_indices = @transform_1, window_bounds = array<i64: 8, 128>}]} {
    %c0 = arith.constant 0 : index
    %c0_0 = arith.constant 0 : index
    %0 = vector.load %arg1[%c0, %c0_0] : memref<8x128xi32, #tpu.memory_space<vmem>>, vector<8x128xi32>
    %1 = vector.extract_strided_slice %0 {offsets = [0, 127], sizes = [8, 1], strides = [1, 1]} : vector<8x128xi32> to vector<8x1xi32>
    %c0_i32 = arith.constant 0 : i32
    %c75_i32 = arith.constant 75 : i32
    %2 = vector.broadcast %c0_i32 : i32 to vector<8x1xi32>
    %3 = arith.maxsi %2, %1 : vector<8x1xi32>
    %4 = vector.broadcast %c75_i32 : i32 to vector<8x1xi32>
    %5 = arith.minsi %4, %3 : vector<8x1xi32>
    %6 = tpu.iota {dimensions = array<i32: 1>} : vector<8x128xi32>
    %c1_i32 = arith.constant 1 : i32
    %7 = tpu.dynamic_rotate %0 by %c1_i32 dim 1 : vector<8x128xi32>, i32 -> vector<8x128xi32>
    %c0_i32_1 = arith.constant 0 : i32
    %8 = vector.broadcast %c0_i32_1 : i32 to vector<8x128xi32>
    %9 = arith.cmpi eq, %6, %8 : vector<8x128xi32>
    %10 = vector.broadcast %5 : vector<8x1xi32> to vector<8x128xi32>
    %11 = arith.cmpi sle, %6, %10 : vector<8x128xi32>
    %c1_i32_2 = arith.constant 1 : i32
    %12 = vector.broadcast %c1_i32_2 : i32 to vector<8x1xi32>
    %13 = arith.addi %5, %12 : vector<8x1xi32>
    %14 = vector.broadcast %13 : vector<8x1xi32> to vector<8x128xi32>
    %15 = arith.cmpi eq, %6, %14 : vector<8x128xi32>
    %c102_i32 = arith.constant 102 : i32
    %c0_i32_3 = arith.constant 0 : i32
    %16 = vector.broadcast %c102_i32 : i32 to vector<8x128xi32>
    %17 = vector.broadcast %c0_i32_3 : i32 to vector<8x128xi32>
    %18 = arith.select %15, %16, %17 : vector<8x128xi1>, vector<8x128xi32>
    %19 = arith.select %11, %7, %18 : vector<8x128xi1>, vector<8x128xi32>
    %c101_i32 = arith.constant 101 : i32
    %20 = vector.broadcast %c101_i32 : i32 to vector<8x128xi32>
    %21 = arith.select %9, %20, %19 : vector<8x128xi1>, vector<8x128xi32>
    %c0_4 = arith.constant 0 : index
    %c0_5 = arith.constant 0 : index
    %22 = vector.load %arg2[%c0_4, %c0_5] : memref<8x128xi32, #tpu.memory_space<vmem>>, vector<8x128xi32>
    tpu.vector_store %arg2[%c0_4, %c0_5], %21 {strides = array<i32>} : memref<8x128xi32, #tpu.memory_space<vmem>>, vector<8x128xi32>,
    return
  }
  func.func @transform_0(%arg0: i32) -> (i32, i32) {
    %c0_i32 = arith.constant 0 : i32
    %c0_i32_0 = arith.constant 0 : i32
    return %arg0, %c0_i32 : i32, i32
  }
  func.func @transform_1(%arg0: i32) -> (i32, i32) {
    %c0_i32 = arith.constant 0 : i32
    %c0_i32_0 = arith.constant 0 : i32
    return %arg0, %c0_i32 : i32, i32
  }
}

</mosaic_0001>

<llo_original>
// kernel: tpu_custom_call.1
$region0: #{tpu_custom_call.1}
  #allocation0 [shape = 'u32[]', space=smem, size = 0x4, offset = 0x4, fixed_abs, tag = 'smem constant byte address 0x4 - core index']
  #allocation1 [shape = 'u32[72,128]{1,0:T(1,128)}', space=vmem, size = 0x9000, scoped, tag = 'internal scratch']
  %s0 = inlined_call_operand.hbm [shape: s32[8,128], index: 0, kind: input, shape index: {}, may-alias: {0,1}]
  %s1 = inlined_call_operand.hbm [shape: s32[8,128], index: 1, kind: output, shape index: {}, may-alias: {0,1}]
  %s2 = sld [smem:[#allocation0]]
  $region18: #{tpu_custom_call.1} parent=0
    _
  %s4 = ssub.s32 1, %s2
  %s5 = scalar_select 0, %s4, %s2
  $region1: #{tpu_custom_call.1} parent=0
    #allocation2 [shape = 'u8[4096]{0}', space=vmem, size = 0x1000, scoped, tag = 'input window, operand 0, single buffered']
    #allocation3 [shape = 's32[1]{0}', space=sflag, size = 0x4, scoped, tag = 'scoped memory for tpu_custom_call.1']
    #allocation4 [shape = 's32[1]{0}', space=sflag, size = 0x4, scoped, tag = 'scoped memory for tpu_custom_call.1']
    #allocation5 [shape = 'u8[4096]{0}', space=vmem, size = 0x1000, scoped, tag = 'output window, operand 0, single buffered']
    %6 = vsyncpa [#allocation3], 0
    %7 = vsyncpa [#allocation4], 0
    // Predicated region
    $region2: #{tpu_custom_call.1} parent=1 // pred_check
      _
    $region3: #{tpu_custom_call.1} parent=1 // pred_check_branch
      %9 = sbr.rel (0) target = $region5
    $region4: #{tpu_custom_call.1} parent=1 // pred_region
      %11 = vsyncadd [#allocation3], 0
      %s13 = sshll.u32 %s0, 4
      %s14 = int_to_ptr.hbm [resolvable:$true] %s13
      %s15 = sshll.u32 [#allocation2], 4
      %s16 = int_to_ptr.vmem [resolvable:$true] %s15
      %18 = dma.hbm_to_vmem [thread:$0]  %s14, 128, %s16, [#allocation3]
    $region5: #{tpu_custom_call.1} parent=1 // pred_fallthru
      _
    // Predicated region
    $region6: #{tpu_custom_call.1} parent=1 // pred_check
      _
    $region7: #{tpu_custom_call.1} parent=1 // pred_check_branch
      %20 = sbr.rel (0) target = $region9
    $region8: #{tpu_custom_call.1} parent=1 // pred_region
      %22 = dma.done [#allocation3], 128
    $region9: #{tpu_custom_call.1} parent=1 // pred_fallthru
      _
    %v23 = vld [vmem:[#allocation2] sm:$0xff]
    %vm24 = vcmp.gt.s32.totalorder %v23, 0
    %v25 = vsel %vm24, %v23, 0
    %vm26 = vcmp.lt.s32.totalorder %v25, 75
    %v27 = vsel %vm26, %v25, 75
    %v28 = vlaneseq
    %v29 = vand.u32 %v28, 127
    %30 = vrot.lane.b32.xlu0 %v23, 1
    %v31 = vpop.permute.xlu0 %30
    %vm32 = vcmp.eq.s32.totalorder %v29, 0
    %33 = vset.pattern.permute.xlu0 127
    %34 = vperm.xlu0 %33, %v27
    %v35 = vpop.permute.xlu0 %34
    %vm36 = vcmp.le.s32.totalorder %v29, %v35
    %v37 = vadd.s32 %v27, 1
    %38 = vset.pattern.permute.xlu0 127
    %39 = vperm.xlu0 %38, %v37
    %v40 = vpop.permute.xlu0 %39
    %vm41 = vcmp.eq.s32.totalorder %v29, %v40
    %v42 = vsel %vm41, 102, 0
    %v43 = vsel %vm36, %v31, %v42
    %v44 = vsel %vm32, 101, %v43
    %45 = vst [vmem:[#allocation5] sm:$0xff] %v44
    // Predicated region
    $region10: #{tpu_custom_call.1} parent=1 // pred_check
      _
    $region11: #{tpu_custom_call.1} parent=1 // pred_check_branch
      %47 = sbr.rel (0) target = $region13
    $region12: #{tpu_custom_call.1} parent=1 // pred_region
      %49 = vsyncadd [#allocation4], 0
      %s51 = sshll.u32 [#allocation5], 4
      %s52 = int_to_ptr.vmem [resolvable:$true] %s51
      %s53 = sshll.u32 %s1, 4
      %s54 = int_to_ptr.hbm [resolvable:$true] %s53
      %56 = dma.vmem_to_hbm [thread:$0]  %s52, 128, %s54, [#allocation4]
    $region13: #{tpu_custom_call.1} parent=1 // pred_fallthru
      _
    // Predicated region
    $region14: #{tpu_custom_call.1} parent=1 // pred_check
      _
    $region15: #{tpu_custom_call.1} parent=1 // pred_check_branch
      %58 = sbr.rel (0) target = $region17
    $region16: #{tpu_custom_call.1} parent=1 // pred_region
      %60 = dma.done [#allocation4], 128
    $region17: #{tpu_custom_call.1} parent=1 // pred_fallthru
      _
    %61 = vsyncpa [#allocation3], 1
    %62 = vsyncpa [#allocation4], 1

</llo_original>
